<compile_context>
chip_gen: v7x
topology: tpu7x:2x2x1
jax: 0.10.0
libtpu: 0.0.40
codegen_flags: <defaults>
</compile_context>

<pallas_src>
import jax
import jax.numpy as jnp
from jax.experimental import pallas as pl
from jax.experimental.pallas import tpu as pltpu

_LANE = 128


def _mish_kernel(x_ref, o_ref):
    x = x_ref[...].astype(jnp.float32)
    # tanh(softplus(x)) == (e^{2x} + 2 e^x) / (e^{2x} + 2 e^x + 2)
    # One exp (EUP) + one reciprocal (EUP); clamp keeps e*e finite.
    e = jnp.exp(jnp.minimum(x, 20.0))
    n = e * (e + 2.0)
    y = x * (n / (n + 2.0))
    o_ref[...] = y.astype(o_ref.dtype)


def mish(x: jax.Array, *, block_bytes: int = 2 * 1024 * 1024) -> jax.Array:
    """Elementwise Mish. Accepts any shape (e.g. NCHW), returns same shape/dtype."""
    orig_shape = x.shape
    orig_dtype = x.dtype
    total = x.size
    itemsize = jnp.dtype(orig_dtype).itemsize

    # Flatten to a lane-dense (rows, 128) slab.  Padding (an extra HBM
    # read+write pass materialized by XLA) only happens for ragged totals;
    # zero-padding is harmless since mish(0) == 0 and the tail is sliced off.
    rows = -(-total // _LANE)
    padded = rows * _LANE
    x_flat = jnp.ravel(x)
    if padded != total:
        x_flat = jnp.pad(x_flat, (0, padded - total))
    x2d = x_flat.reshape(rows, _LANE)

    # Row tile sized by a byte budget (multiple of 8 sublanes).  The last grid
    # block may be partial; Pallas masks the out-of-bounds stores, and any
    # garbage in the padded read region only affects dropped outputs
    # (pure elementwise op, no cross-element contamination).
    tr = max(8, (block_bytes // (_LANE * itemsize)) // 8 * 8)
    if rows <= tr:
        tr = rows  # single full-array block (always a legal block shape)
    grid = (pl.cdiv(rows, tr),)

    out2d = pl.pallas_call(
        _mish_kernel,
        out_shape=jax.ShapeDtypeStruct((rows, _LANE), orig_dtype),
        grid_spec=pltpu.PrefetchScalarGridSpec(
            num_scalar_prefetch=0,
            grid=grid,
            in_specs=[pl.BlockSpec((tr, _LANE), lambda i: (i, 0))],
            out_specs=pl.BlockSpec((tr, _LANE), lambda i: (i, 0)),
        ),
        compiler_params=pltpu.CompilerParams(
            # "parallel" lets the 1-D grid shard across both TensorCores on v7x.
            dimension_semantics=("parallel",),
        ),
    )(x2d)

    out_flat = out2d.reshape(-1)
    if padded != total:
        out_flat = out_flat[:total]
    return out_flat.reshape(orig_shape)


if __name__ == "__main__":
    key = jax.random.PRNGKey(0)
    x = jax.random.normal(key, (2, 4, 16, 16), dtype=jnp.float32)  # NCHW

    y = mish(x)
    jax.block_until_ready(y)

    # Reference check against plain-JAX Mish.
    ref = x * jnp.tanh(jax.nn.softplus(x))
    assert y.shape == x.shape and y.dtype == x.dtype
    assert jnp.allclose(y, ref, atol=1e-5, rtol=1e-5)

    print("KERNEL_OK")
</pallas_src>

<mosaic_0001>
module attributes {stable_mosaic.version = 11 : i64} {
  func.func @_mish_kernel(%arg0: i32, %arg1: memref<16x128xf32, #tpu.memory_space<vmem>>, %arg2: memref<16x128xf32, #tpu.memory_space<vmem>>) attributes {dimension_semantics = [#tpu.dimension_semantics<parallel>], iteration_bounds = array<i64: 1>, scalar_prefetch = 0 : i64, scratch_operands = 0 : i64, tpu.core_type = #tpu.core_type<tc>, window_params = [{transform_indices = @transform_0, window_bounds = array<i64: 16, 128>}, {transform_indices = @transform_1, window_bounds = array<i64: 16, 128>}]} {
    %c0 = arith.constant 0 : index
    %c0_0 = arith.constant 0 : index
    %0 = vector.load %arg1[%c0, %c0_0] : memref<16x128xf32, #tpu.memory_space<vmem>>, vector<16x128xf32>
    %cst = arith.constant 2.000000e+01 : f32
    %1 = vector.broadcast %cst : f32 to vector<16x128xf32>
    %2 = arith.minimumf %0, %1 : vector<16x128xf32>
    %3 = math.exp %2 : vector<16x128xf32>
    %cst_1 = arith.constant 2.000000e+00 : f32
    %4 = vector.broadcast %cst_1 : f32 to vector<16x128xf32>
    %5 = arith.addf %3, %4 : vector<16x128xf32>
    %6 = arith.mulf %3, %5 : vector<16x128xf32>
    %cst_2 = arith.constant 2.000000e+00 : f32
    %7 = vector.broadcast %cst_2 : f32 to vector<16x128xf32>
    %8 = arith.addf %6, %7 : vector<16x128xf32>
    %9 = arith.divf %6, %8 : vector<16x128xf32>
    %10 = arith.mulf %0, %9 : vector<16x128xf32>
    %c0_3 = arith.constant 0 : index
    %c0_4 = arith.constant 0 : index
    %11 = vector.load %arg2[%c0_3, %c0_4] : memref<16x128xf32, #tpu.memory_space<vmem>>, vector<16x128xf32>
    tpu.vector_store %arg2[%c0_3, %c0_4], %10 {strides = array<i32>} : memref<16x128xf32, #tpu.memory_space<vmem>>, vector<16x128xf32>,
    return
  }
  func.func @transform_0(%arg0: i32) -> (i32, i32) {
    %c0_i32 = arith.constant 0 : i32
    %c0_i32_0 = arith.constant 0 : i32
    return %arg0, %c0_i32 : i32, i32
  }
  func.func @transform_1(%arg0: i32) -> (i32, i32) {
    %c0_i32 = arith.constant 0 : i32
    %c0_i32_0 = arith.constant 0 : i32
    return %arg0, %c0_i32 : i32, i32
  }
}

</mosaic_0001>

<llo_original>
// kernel: tpu_custom_call.1
$region0: #{tpu_custom_call.1}
  #allocation0 [shape = 'u32[]', space=smem, size = 0x4, offset = 0x4, fixed_abs, tag = 'smem constant byte address 0x4 - core index']
  #allocation1 [shape = 'u32[144,128]{1,0:T(1,128)}', space=vmem, size = 0x12000, scoped, tag = 'internal scratch']
  %s0 = inlined_call_operand.hbm [shape: f32[16,128], index: 0, kind: input, shape index: {}]
  %s1 = inlined_call_operand.hbm [shape: f32[16,128], index: 1, kind: output, shape index: {}]
  %s2 = sld [smem:[#allocation0]]
  $region18: #{tpu_custom_call.1} parent=0
    _
  %s4 = ssub.s32 1, %s2
  %s5 = scalar_select 0, %s4, %s2
  $region1: #{tpu_custom_call.1} parent=0
    #allocation2 [shape = 'u8[8192]{0}', space=vmem, size = 0x2000, scoped, tag = 'input window, operand 0, single buffered']
    #allocation3 [shape = 's32[1]{0}', space=sflag, size = 0x4, scoped, tag = 'scoped memory for tpu_custom_call.1']
    #allocation4 [shape = 's32[1]{0}', space=sflag, size = 0x4, scoped, tag = 'scoped memory for tpu_custom_call.1']
    #allocation5 [shape = 'u8[8192]{0}', space=vmem, size = 0x2000, scoped, tag = 'output window, operand 0, single buffered']
    %6 = vsyncpa [#allocation3], 0
    %7 = vsyncpa [#allocation4], 0
    // Predicated region
    $region2: #{tpu_custom_call.1} parent=1 // pred_check
      _
    $region3: #{tpu_custom_call.1} parent=1 // pred_check_branch
      %9 = sbr.rel (0) target = $region5
    $region4: #{tpu_custom_call.1} parent=1 // pred_region
      %s11 = ssub.s32 256, 256
      %12 = vsyncadd [#allocation3], %s11
      %s13 = sshll.u32 [#allocation2], 4
      %s14 = int_to_ptr.vmem [resolvable:$true] %s13
      %19 = dma.hbm_to_vmem [thread:$0]  %s0, 256, %s14, [#allocation3], 128, 128, 8
    $region5: #{tpu_custom_call.1} parent=1 // pred_fallthru
      _
    // Predicated region
    $region6: #{tpu_custom_call.1} parent=1 // pred_check
      _
    $region7: #{tpu_custom_call.1} parent=1 // pred_check_branch
      %21 = sbr.rel (0) target = $region9
    $region8: #{tpu_custom_call.1} parent=1 // pred_region
      %22 = dma.done [#allocation3], 256
    $region9: #{tpu_custom_call.1} parent=1 // pred_fallthru
      _
    %v23 = vld [vmem:[#allocation2] sm:$0xff]
    %v24 = vld [vmem:[#allocation2 + $0x8] sm:$0xff]
    %v25 = vmin.f32 %v23, 20.0
    %v26 = vmin.f32 %v24, 20.0
    %v27 = vmul.f32 %v25, 1.442695
    %v28 = vpow.pop %v27
    %v29 = vmul.f32 %v26, 1.442695
    %v30 = vpow.pop %v29
    %v31 = vadd.f32 %v28, 2.0
    %v32 = vadd.f32 %v30, 2.0
    %v33 = vmul.f32 %v28, %v31
    %v34 = vmul.f32 %v30, %v32
    %v35 = vadd.f32 %v33, 2.0
    %v36 = vadd.f32 %v34, 2.0
    %v37 = vrcp.pop %v35
    %v38 = vmul.f32 %v33, %v37
    %v39 = vrcp.pop %v36
    %v40 = vmul.f32 %v34, %v39
    %v41 = vmul.f32 %v23, %v38
    %v42 = vmul.f32 %v24, %v40
    %43 = vst [vmem:[#allocation5] sm:$0xff] %v41
    %44 = vst [vmem:[#allocation5 + $0x8] sm:$0xff] %v42
    // Predicated region
    $region10: #{tpu_custom_call.1} parent=1 // pred_check
      _
    $region11: #{tpu_custom_call.1} parent=1 // pred_check_branch
      %46 = sbr.rel (0) target = $region13
    $region12: #{tpu_custom_call.1} parent=1 // pred_region
      %s48 = ssub.s32 256, 256
      %49 = vsyncadd [#allocation4], %s48
      %s50 = sshll.u32 [#allocation5], 4
      %s51 = int_to_ptr.vmem [resolvable:$true] %s50
      %56 = dma.vmem_to_hbm [thread:$0]  %s51, 256, %s1, [#allocation4], 128, 128, 8
    $region13: #{tpu_custom_call.1} parent=1 // pred_fallthru
      _
    // Predicated region
    $region14: #{tpu_custom_call.1} parent=1 // pred_check
      _
    $region15: #{tpu_custom_call.1} parent=1 // pred_check_branch
      %58 = sbr.rel (0) target = $region17
    $region16: #{tpu_custom_call.1} parent=1 // pred_region
      %59 = dma.done [#allocation4], 256
    $region17: #{tpu_custom_call.1} parent=1 // pred_fallthru
      _
    %60 = vsyncpa [#allocation3], 1
    %61 = vsyncpa [#allocation4], 1

</llo_original>
